<compile_context>
chip_gen: v7x
topology: tpu7x:2x2x1
jax: 0.10.0
libtpu: 0.0.40
codegen_flags: <defaults>
</compile_context>

<pallas_src>
import jax
import jax.numpy as jnp
from jax import lax
from jax.experimental import pallas as pl
from jax.experimental.pallas import tpu as pltpu

SMOOTH = 1e-6
LANE = 128
SUBLANE = 8


def _round_up(x, m):
    return ((x + m - 1) // m) * m


def _pick_vmem_limit_bytes():
    """Half of physical VMEM, capped at 64 MiB (v5e/v6e -> 64 MiB, v7x -> 32 MiB)."""
    try:
        cap = pltpu.get_tpu_info().vmem_capacity_bytes
    except Exception:
        cap = None
    if not cap:
        return 32 * 1024 * 1024
    return int(min(cap // 2, 64 * 1024 * 1024))


def _make_dice_kernel(tr, total_rows, needs_mask):
    """grid = (batch, row-chunks). Per-sample partials live in two (8,128)
    f32 VMEM scratches; dice is written once on the last chunk of a sample."""

    def kernel(x_ref, t_ref, dice_ref, acc_inter, acc_sum):
        r = pl.program_id(1)
        nr = pl.num_programs(1)

        @pl.when(r == 0)
        def _init():
            acc_inter[...] = jnp.zeros_like(acc_inter)
            acc_sum[...] = jnp.zeros_like(acc_sum)

        xf = x_ref[...].astype(jnp.float32)   # (tr, 128) chunk of this sample
        tf = t_ref[...].astype(jnp.float32)

        if needs_mask:
            # Last chunk may extend past the real row count; out-of-bounds
            # rows contain unspecified data -> zero them (pure VALU select).
            row_ids = lax.broadcasted_iota(jnp.int32, (tr, LANE), 0)
            valid = row_ids < (total_rows - r * tr)
            xf = jnp.where(valid, xf, 0.0)
            tf = jnp.where(valid, tf, 0.0)

        prod = xf * tf
        ssum = xf + tf                        # sum(x) + sum(t) folded together

        if tr % SUBLANE == 0:
            # Fold tr/8 vregs into one (8,128) vreg: lane-wise adds only.
            acc_inter[...] += prod.reshape(tr // SUBLANE, SUBLANE, LANE).sum(axis=0)
            acc_sum[...] += ssum.reshape(tr // SUBLANE, SUBLANE, LANE).sum(axis=0)
        else:
            # Tiny-sample fallback (single chunk, fewer than 8 rows).
            acc_inter[0:1, :] += prod.sum(axis=0, keepdims=True)
            acc_sum[0:1, :] += ssum.sum(axis=0, keepdims=True)

        @pl.when(r == nr - 1)
        def _finalize():
            inter = jnp.sum(acc_inter[...])   # one-vreg cross-lane reduce
            s = jnp.sum(acc_sum[...])
            dice = (2.0 * inter + SMOOTH) / (s + SMOOTH)
            dice_ref[...] = jnp.full(dice_ref.shape, dice, dtype=jnp.float32)

    return kernel


def dice_loss(inputs, targets, *, max_rows_per_block=None):
    """inputs, targets: (B, C, H, W) arrays (NCHW, any float/int dtype).
    Returns scalar f32 loss. `max_rows_per_block` is a test hook to force a
    multi-chunk reduction at small shapes."""
    assert inputs.shape == targets.shape
    B = inputs.shape[0]
    N = int(inputs.size) // B

    # Native dtype through HBM; cast in-kernel.
    x = inputs.reshape(B, N)
    t = targets.reshape(B, N)

    rem = (-N) % LANE
    if rem:
        # TODO(synk): a sub-128 tail forces a one-time pad copy of both
        # tensors (full HBM read+write). Typical segmentation shapes
        # (C*H*W multiple of 128) never take this branch.
        n128 = _round_up(N, SUBLANE * LANE)
        x = jnp.pad(x, ((0, 0), (0, n128 - N)))
        t = jnp.pad(t, ((0, 0), (0, n128 - N)))
    else:
        n128 = N
    R = n128 // LANE
    x = x.reshape(B, R, LANE)                 # lane/sublane-dense view (no copy)
    t = t.reshape(B, R, LANE)

    # Generation-aware block sizing: ~limit/8 bytes per input block so that
    # 2 inputs x 2 pipeline buffers stay under half the scoped limit, with
    # plenty of headroom for the 8 KiB accumulators + tiny output.
    vmem_limit = _pick_vmem_limit_bytes()
    itemsize = max(jnp.dtype(x.dtype).itemsize, jnp.dtype(t.dtype).itemsize)
    block_bytes = vmem_limit // 8
    tr_cap = max(SUBLANE, (block_bytes // (LANE * itemsize)) // SUBLANE * SUBLANE)
    if max_rows_per_block is not None:
        tr_cap = min(tr_cap, max(SUBLANE, (max_rows_per_block // SUBLANE) * SUBLANE))

    if R <= tr_cap:
        # Single (or near-single) chunk: use the full row extent when it is
        # 8-aligned (or tiny), otherwise an 8-aligned block with a masked tail.
        tr = R if (R % SUBLANE == 0 or R < SUBLANE) else (R // SUBLANE) * SUBLANE
    else:
        tr = tr_cap
    nr = pl.cdiv(R, tr)
    needs_mask = (nr * tr != R)               # ragged last chunk -> mask rows

    in_bytes = B * n128 * (jnp.dtype(x.dtype).itemsize + jnp.dtype(t.dtype).itemsize)
    cost = pl.CostEstimate(
        flops=4 * B * n128,
        transcendentals=0,
        bytes_accessed=in_bytes + B * SUBLANE * LANE * 4,
    )

    dice = pl.pallas_call(
        _make_dice_kernel(tr, R, needs_mask),
        out_shape=jax.ShapeDtypeStruct((B, SUBLANE, LANE), jnp.float32),
        grid_spec=pltpu.PrefetchScalarGridSpec(
            num_scalar_prefetch=0,
            grid=(B, nr),
            in_specs=[
                pl.BlockSpec((pl.Squeezed(), tr, LANE), lambda b, r: (b, r, 0)),
                pl.BlockSpec((pl.Squeezed(), tr, LANE), lambda b, r: (b, r, 0)),
            ],
            # Per-sample output tile, resident across the reduction axis.
            out_specs=pl.BlockSpec((pl.Squeezed(), SUBLANE, LANE),
                                   lambda b, r: (b, 0, 0)),
            scratch_shapes=[
                pltpu.VMEM((SUBLANE, LANE), jnp.float32),   # partial x*t
                pltpu.VMEM((SUBLANE, LANE), jnp.float32),   # partial x+t
            ],
        ),
        compiler_params=pltpu.CompilerParams(
            dimension_semantics=("parallel", "arbitrary"),
            vmem_limit_bytes=vmem_limit,
        ),
        cost_estimate=cost,
    )(x, t)

    # Tiny epilogue in plain JAX so the batch axis stays parallel in-kernel.
    return 1.0 - jnp.mean(dice[:, 0, 0])


def _dice_loss_ref(inputs, targets):
    B = inputs.shape[0]
    x = inputs.reshape(B, -1).astype(jnp.float32)
    t = targets.reshape(B, -1).astype(jnp.float32)
    inter = jnp.sum(x * t, axis=1)
    dice = (2.0 * inter + SMOOTH) / (jnp.sum(x, axis=1) + jnp.sum(t, axis=1) + SMOOTH)
    return 1.0 - jnp.mean(dice)


if __name__ == "__main__":
    key = jax.random.PRNGKey(0)
    k1, k2 = jax.random.split(key)

    # Primary shape implied by the module: NCHW probabilities + binary mask.
    B, C, H, W = 2, 4, 16, 16
    inputs = jax.random.uniform(k1, (B, C, H, W), dtype=jnp.float32)
    targets = (jax.random.uniform(k2, (B, C, H, W)) > 0.5).astype(jnp.float32)
    loss = jax.block_until_ready(dice_loss(inputs, targets))
    ref = _dice_loss_ref(inputs, targets)
    assert jnp.allclose(loss, ref, atol=1e-5, rtol=1e-5), (loss, ref)

    # Multi-chunk reduction path: R=20 rows, tr=8 -> nr=3 with a ragged
    # (in-kernel masked) last chunk; exercises init / accumulate / finalize.
    k3, k4 = jax.random.split(k2)
    x2 = jax.random.uniform(k3, (2, 4, 16, 40), dtype=jnp.float32)
    t2 = (jax.random.uniform(k4, (2, 4, 16, 40)) > 0.5).astype(jnp.float32)
    loss2 = jax.block_until_ready(dice_loss(x2, t2, max_rows_per_block=8))
    ref2 = _dice_loss_ref(x2, t2)
    assert jnp.allclose(loss2, ref2, atol=1e-5, rtol=1e-5), (loss2, ref2)

    # Non-128-aligned tail (wrapper zero-pad path).
    k5, k6 = jax.random.split(k4)
    x3 = jax.random.uniform(k5, (2, 3, 15, 15), dtype=jnp.float32)
    t3 = (jax.random.uniform(k6, (2, 3, 15, 15)) > 0.5).astype(jnp.float32)
    loss3 = jax.block_until_ready(dice_loss(x3, t3, max_rows_per_block=8))
    ref3 = _dice_loss_ref(x3, t3)
    assert jnp.allclose(loss3, ref3, atol=1e-5, rtol=1e-5), (loss3, ref3)

    print("KERNEL_OK")
</pallas_src>

<mosaic_0001>
module attributes {stable_mosaic.version = 11 : i64} {
  func.func @kernel(%arg0: i32, %arg1: i32, %arg2: memref<1x8x128xf32, #tpu.memory_space<vmem>>, %arg3: memref<1x8x128xf32, #tpu.memory_space<vmem>>, %arg4: memref<1x8x128xf32, #tpu.memory_space<vmem>>, %arg5: memref<8x128xf32, #tpu.memory_space<vmem>>, %arg6: memref<8x128xf32, #tpu.memory_space<vmem>>) attributes {dimension_semantics = [#tpu.dimension_semantics<parallel>, #tpu.dimension_semantics<arbitrary>], iteration_bounds = array<i64: 2, 1>, scalar_prefetch = 0 : i64, scratch_operands = 2 : i64, tpu.core_type = #tpu.core_type<tc>, window_params = [{transform_indices = @transform_0, window_bounds = array<i64: 1, 8, 128>}, {transform_indices = @transform_1, window_bounds = array<i64: 1, 8, 128>}, {transform_indices = @transform_2, window_bounds = array<i64: 1, 8, 128>}]} {
    %c0_i32 = arith.constant 0 : i32
    %0 = arith.cmpi eq, %arg1, %c0_i32 : i32
    %1 = arith.extui %0 : i1 to i32
    %c0_i32_0 = arith.constant 0 : i32
    %2 = arith.cmpi ne, %1, %c0_i32_0 : i32
    scf.if %2 {
      %cst_17 = arith.constant 0.000000e+00 : f32
      %22 = vector.broadcast %cst_17 : f32 to vector<8x128xf32>
      %c0_18 = arith.constant 0 : index
      %c0_19 = arith.constant 0 : index
      %23 = vector.load %arg5[%c0_18, %c0_19] : memref<8x128xf32, #tpu.memory_space<vmem>>, vector<8x128xf32>
      tpu.vector_store %arg5[%c0_18, %c0_19], %22 {strides = array<i32>} : memref<8x128xf32, #tpu.memory_space<vmem>>, vector<8x128xf32>,
      %cst_20 = arith.constant 0.000000e+00 : f32
      %24 = vector.broadcast %cst_20 : f32 to vector<8x128xf32>
      %c0_21 = arith.constant 0 : index
      %c0_22 = arith.constant 0 : index
      %25 = vector.load %arg6[%c0_21, %c0_22] : memref<8x128xf32, #tpu.memory_space<vmem>>, vector<8x128xf32>
      tpu.vector_store %arg6[%c0_21, %c0_22], %24 {strides = array<i32>} : memref<8x128xf32, #tpu.memory_space<vmem>>, vector<8x128xf32>,
    } else {
    }
    %c0 = arith.constant 0 : index
    %c0_1 = arith.constant 0 : index
    %c0_2 = arith.constant 0 : index
    %3 = vector.load %arg2[%c0, %c0_1, %c0_2] : memref<1x8x128xf32, #tpu.memory_space<vmem>>, vector<1x8x128xf32>
    %4 = vector.shape_cast %3 : vector<1x8x128xf32> to vector<8x128xf32>
    %c0_3 = arith.constant 0 : index
    %c0_4 = arith.constant 0 : index
    %c0_5 = arith.constant 0 : index
    %5 = vector.load %arg3[%c0_3, %c0_4, %c0_5] : memref<1x8x128xf32, #tpu.memory_space<vmem>>, vector<1x8x128xf32>
    %6 = vector.shape_cast %5 : vector<1x8x128xf32> to vector<8x128xf32>
    %7 = arith.mulf %4, %6 : vector<8x128xf32>
    %8 = arith.addf %4, %6 : vector<8x128xf32>
    %c0_6 = arith.constant 0 : index
    %c0_7 = arith.constant 0 : index
    %9 = vector.load %arg5[%c0_6, %c0_7] : memref<8x128xf32, #tpu.memory_space<vmem>>, vector<8x128xf32>
    %10 = vector.shape_cast %7 : vector<8x128xf32> to vector<1x8x128xf32>
    %cst = arith.constant dense<0.000000e+00> : vector<8x128xf32>
    %11 = vector.multi_reduction <add>, %10, %cst [0] : vector<1x8x128xf32> to vector<8x128xf32>
    %12 = arith.addf %9, %11 : vector<8x128xf32>
    %c0_8 = arith.constant 0 : index
    %c0_9 = arith.constant 0 : index
    %13 = vector.load %arg5[%c0_8, %c0_9] : memref<8x128xf32, #tpu.memory_space<vmem>>, vector<8x128xf32>
    tpu.vector_store %arg5[%c0_8, %c0_9], %12 {strides = array<i32>} : memref<8x128xf32, #tpu.memory_space<vmem>>, vector<8x128xf32>,
    %c0_10 = arith.constant 0 : index
    %c0_11 = arith.constant 0 : index
    %14 = vector.load %arg6[%c0_10, %c0_11] : memref<8x128xf32, #tpu.memory_space<vmem>>, vector<8x128xf32>
    %15 = vector.shape_cast %8 : vector<8x128xf32> to vector<1x8x128xf32>
    %cst_12 = arith.constant dense<0.000000e+00> : vector<8x128xf32>
    %16 = vector.multi_reduction <add>, %15, %cst_12 [0] : vector<1x8x128xf32> to vector<8x128xf32>
    %17 = arith.addf %14, %16 : vector<8x128xf32>
    %c0_13 = arith.constant 0 : index
    %c0_14 = arith.constant 0 : index
    %18 = vector.load %arg6[%c0_13, %c0_14] : memref<8x128xf32, #tpu.memory_space<vmem>>, vector<8x128xf32>
    tpu.vector_store %arg6[%c0_13, %c0_14], %17 {strides = array<i32>} : memref<8x128xf32, #tpu.memory_space<vmem>>, vector<8x128xf32>,
    %c0_i32_15 = arith.constant 0 : i32
    %19 = arith.cmpi eq, %arg1, %c0_i32_15 : i32
    %20 = arith.extui %19 : i1 to i32
    %c0_i32_16 = arith.constant 0 : i32
    %21 = arith.cmpi ne, %20, %c0_i32_16 : i32
    scf.if %21 {
      %c0_17 = arith.constant 0 : index
      %c0_18 = arith.constant 0 : index
      %22 = vector.load %arg5[%c0_17, %c0_18] : memref<8x128xf32, #tpu.memory_space<vmem>>, vector<8x128xf32>
      %23 = vector.shape_cast %22 : vector<8x128xf32> to vector<1x8x128xf32>
      %cst_19 = arith.constant dense<0.000000e+00> : vector<1xf32>
      %24 = vector.multi_reduction <add>, %23, %cst_19 [1, 2] : vector<1x8x128xf32> to vector<1xf32>
      %25 = vector.shape_cast %24 : vector<1xf32> to vector<1x1x1xf32>
      %26 = vector.extract %25[0, 0, 0] : f32 from vector<1x1x1xf32>
      %c0_20 = arith.constant 0 : index
      %c0_21 = arith.constant 0 : index
      %27 = vector.load %arg6[%c0_20, %c0_21] : memref<8x128xf32, #tpu.memory_space<vmem>>, vector<8x128xf32>
      %28 = vector.shape_cast %27 : vector<8x128xf32> to vector<1x8x128xf32>
      %cst_22 = arith.constant dense<0.000000e+00> : vector<1xf32>
      %29 = vector.multi_reduction <add>, %28, %cst_22 [1, 2] : vector<1x8x128xf32> to vector<1xf32>
      %30 = vector.shape_cast %29 : vector<1xf32> to vector<1x1x1xf32>
      %31 = vector.extract %30[0, 0, 0] : f32 from vector<1x1x1xf32>
      %cst_23 = arith.constant 2.000000e+00 : f32
      %32 = arith.mulf %cst_23, %26 : f32
      %cst_24 = arith.constant 9.99999997E-7 : f32
      %33 = arith.addf %32, %cst_24 : f32
      %cst_25 = arith.constant 9.99999997E-7 : f32
      %34 = arith.addf %31, %cst_25 : f32
      %35 = arith.divf %33, %34 : f32
      %36 = vector.broadcast %35 : f32 to vector<8x128xf32>
      %c0_26 = arith.constant 0 : index
      %c0_27 = arith.constant 0 : index
      %c0_28 = arith.constant 0 : index
      %37 = vector.load %arg4[%c0_26, %c0_27, %c0_28] : memref<1x8x128xf32, #tpu.memory_space<vmem>>, vector<1x8x128xf32>
      %38 = vector.shape_cast %37 : vector<1x8x128xf32> to vector<8x128xf32>
      %39 = vector.shape_cast %36 : vector<8x128xf32> to vector<1x8x128xf32>
      tpu.vector_store %arg4[%c0_26, %c0_27, %c0_28], %39 {strides = array<i32>} : memref<1x8x128xf32, #tpu.memory_space<vmem>>, vector<1x8x128xf32>,
    } else {
    }
    return
  }
  func.func @transform_0(%arg0: i32, %arg1: i32) -> (i32, i32, i32) {
    %c0_i32 = arith.constant 0 : i32
    %c0_i32_0 = arith.constant 0 : i32
    return %arg0, %arg1, %c0_i32 : i32, i32, i32
  }
  func.func @transform_1(%arg0: i32, %arg1: i32) -> (i32, i32, i32) {
    %c0_i32 = arith.constant 0 : i32
    %c0_i32_0 = arith.constant 0 : i32
    return %arg0, %arg1, %c0_i32 : i32, i32, i32
  }
  func.func @transform_2(%arg0: i32, %arg1: i32) -> (i32, i32, i32) {
    %c0_i32 = arith.constant 0 : i32
    %c0_i32_0 = arith.constant 0 : i32
    %c0_i32_1 = arith.constant 0 : i32
    return %arg0, %c0_i32, %c0_i32_0 : i32, i32, i32
  }
}

</mosaic_0001>

<llo_original>
// kernel: tpu_custom_call.1
$region0: #{tpu_custom_call.1}
  #allocation0 [shape = 'u32[]', space=smem, size = 0x4, offset = 0x4, fixed_abs, tag = 'smem constant byte address 0x4 - core index']
  #allocation1 [shape = 'u32[144,128]{1,0:T(1,128)}', space=vmem, size = 0x12000, scoped, tag = 'internal scratch']
  #allocation2 [shape = 'f32[8,128]{1,0:T(8,128)}', space=vmem, size = 0x1000, scoped, tag = 'scratch operand']
  #allocation3 [shape = 'f32[8,128]{1,0:T(8,128)}', space=vmem, size = 0x1000, scoped, tag = 'scratch operand']
  %s0 = inlined_call_operand.hbm [shape: f32[2,8,128], index: 0, kind: input, shape index: {}]
  %s1 = inlined_call_operand.hbm [shape: f32[2,8,128], index: 1, kind: input, shape index: {}]
  %s2 = inlined_call_operand.hbm [shape: f32[2,8,128], index: 2, kind: output, shape index: {}]
  %s3 = sld [smem:[#allocation0]]
  $region57: #{tpu_custom_call.1} parent=0
    _
  %s5 = ssub.s32 1, %s3
  %s6 = scalar_select 0, %s5, %s3
  $region1: #{tpu_custom_call.1} parent=0
    #allocation4 [shape = 'u8[8192]{0}', space=vmem, size = 0x2000, scoped, tag = 'input window, operand 0']
    #allocation5 [shape = 's32[2]{0}', space=sflag, size = 0x8, scoped, tag = 'scoped memory for tpu_custom_call.1']
    #allocation6 [shape = 's32[2]{0}', space=sflag, size = 0x8, scoped, tag = 'scoped memory for tpu_custom_call.1']
    #allocation7 [shape = 'u8[8192]{0}', space=vmem, size = 0x2000, scoped, tag = 'input window, operand 1']
    #allocation8 [shape = 's32[2]{0}', space=sflag, size = 0x8, scoped, tag = 'scoped memory for tpu_custom_call.1']
    #allocation9 [shape = 'u8[8192]{0}', space=vmem, size = 0x2000, scoped, tag = 'output window, operand 0']
    %7 = vsyncpa [#allocation5], 0
    %s8 = scalar_lea.sflag [#allocation5], 1
    %9 = vsyncpa %s8, 0
    %10 = vsyncpa [#allocation8], 0
    %s11 = scalar_lea.sflag [#allocation8], 1
    %12 = vsyncpa %s11, 0
    %13 = vsyncpa [#allocation6], 0
    %s14 = scalar_lea.sflag [#allocation6], 1
    %15 = vsyncpa %s14, 0
    loop: start=0, step=1, limit=4
    $region2: #{tpu_custom_call.1} parent=1 // loop_pre_header
      _
    $region3: #{tpu_custom_call.1} parent=1 // loop_header
      %s17 = sphi 0, %s21
      %p18 = scmp.ge.s32.totalorder %s17, 4
      %s24 = sphi 0, %s36
      %s25 = sphi 0, %s32
      %s26 = sphi 0, %s24
      %s27 = sphi 0, %s25
      %s28 = sphi 0, %s26
      %s29 = sphi 0, %s27
      %s41 = sphi 0, %s43
      %s44 = sphi 0, %s41
      %s45 = sphi 0, %s44
      %s61 = sphi 0, %s45
      %s69 = sphi 0, %s71
      %s72 = sphi 0, %s69
      %s73 = sphi 0, %s72
      %s89 = sphi 0, %s73
      %s95 = sphi 0, %s97
      %s98 = sphi 0, %s95
      %s99 = sphi 0, %s98
      %s115 = sphi 0, %s99
    $region4: #{tpu_custom_call.1} parent=1 // loop_header_branch
      %20 = sbr.rel (%p18) target = $region8
    $region5: #{tpu_custom_call.1} parent=1 // loop_body
      %s22 = ssub.s32 %s17, 1
      %s23 = ssub.s32 %s17, 2
      %s30 = sadd.s32 1, %s25
      %p31 = scmp.ge.s32.totalorder %s30, 1
      %s32 = scalar_select %p31, 0, %s30
      %s33 = sadd.s32 1, %s24
      %s34 = scalar_select %p31, %s33, %s24
      %p35 = scmp.ge.s32.totalorder %s34, 2
      %s36 = scalar_select %p35, 0, %s34
      %s37 = ssub.s32 %s24, %s36
      %s38 = ssub.s32 %s25, %s32
      %s39 = sor.u32 %s37, %s38
      %p40 = scmp.eq.s32.totalorder %s39, 0
      %s42 = sadd.s32 %s41, 1
      %s43 = scalar_select %p40, %s41, %s42
      %p46 = pneg %p40
      %p47 = scmp.eq.s32.totalorder %s17, 1
      %p48 = por %p46, %p47
      %p49 = scmp.ne.s32.totalorder %s41, %s44
      %p50 = scmp.eq.s32.totalorder %s17, 0
      %p51 = por %p49, %p50
      %p52 = scmp.ne.s32.totalorder %s41, %s44
      %p53 = scmp.eq.s32.totalorder %s22, 1
      %p54 = por %p52, %p53
      %p55 = scmp.ne.s32.totalorder %s44, %s45
      %p56 = scmp.eq.s32.totalorder %s22, 0
      %p57 = por %p55, %p56
      %p58 = scmp.ne.s32.totalorder %s44, %s45
      %p59 = scmp.eq.s32.totalorder %s23, 1
      %p60 = por %p58, %p59
      %p62 = scmp.ne.s32.totalorder %s45, %s61
      %p63 = scmp.eq.s32.totalorder %s23, 0
      %p64 = por %p62, %p63
      %s65 = ssub.s32 %s24, %s36
      %s66 = ssub.s32 %s25, %s32
      %s67 = sor.u32 %s65, %s66
      %p68 = scmp.eq.s32.totalorder %s67, 0
      %s70 = sadd.s32 %s69, 1
      %s71 = scalar_select %p68, %s69, %s70
      %p74 = pneg %p68
      %p75 = scmp.eq.s32.totalorder %s17, 1
      %p76 = por %p74, %p75
      %p77 = scmp.ne.s32.totalorder %s69, %s72
      %p78 = scmp.eq.s32.totalorder %s17, 0
      %p79 = por %p77, %p78
      %p80 = scmp.ne.s32.totalorder %s69, %s72
      %p81 = scmp.eq.s32.totalorder %s22, 1
      %p82 = por %p80, %p81
      %p83 = scmp.ne.s32.totalorder %s72, %s73
      %p84 = scmp.eq.s32.totalorder %s22, 0
      %p85 = por %p83, %p84
      %p86 = scmp.ne.s32.totalorder %s72, %s73
      %p87 = scmp.eq.s32.totalorder %s23, 1
      %p88 = por %p86, %p87
      %p90 = scmp.ne.s32.totalorder %s73, %s89
      %p91 = scmp.eq.s32.totalorder %s23, 0
      %p92 = por %p90, %p91
      %s93 = ssub.s32 %s24, %s36
      %p94 = scmp.eq.s32.totalorder %s93, 0
      %s96 = sadd.s32 %s95, 1
      %s97 = scalar_select %p94, %s95, %s96
      %p100 = pneg %p94
      %p101 = scmp.eq.s32.totalorder %s17, 1
      %p102 = por %p100, %p101
      %p103 = scmp.ne.s32.totalorder %s95, %s98
      %p104 = scmp.eq.s32.totalorder %s17, 0
      %p105 = por %p103, %p104
      %p106 = scmp.ne.s32.totalorder %s95, %s98
      %p107 = scmp.eq.s32.totalorder %s22, 1
      %p108 = por %p106, %p107
      %p109 = scmp.ne.s32.totalorder %s98, %s99
      %p110 = scmp.eq.s32.totalorder %s22, 0
      %p111 = por %p109, %p110
      %p112 = scmp.ne.s32.totalorder %s98, %s99
      %p113 = scmp.eq.s32.totalorder %s23, 1
      %p114 = por %p112, %p113
      %p116 = scmp.ne.s32.totalorder %s99, %s115
      %p117 = scmp.eq.s32.totalorder %s23, 0
      %p118 = por %p116, %p117
      %p119 = scmp.le.s32.totalorder 1, %s17
      %p120 = scmp.lt.s32.totalorder %s17, 3
      %p121 = pnand %p119, %p120
      %p122 = pneg %p121
      // Predicated region
      $region9: #{tpu_custom_call.1} parent=5 // pred_check
        _
      $region10: #{tpu_custom_call.1} parent=5 // pred_check_branch
        %124 = sbr.rel (%p121) target = $region12
      $region11: #{tpu_custom_call.1} parent=5 // pred_region
        %s125 = ssub.s32 %s17, 1
      $region12: #{tpu_custom_call.1} parent=5 // pred_fallthru
        _
      %p126 = scmp.lt.s32.totalorder %s17, 2
      // Predicated region
      $region13: #{tpu_custom_call.1} parent=5 // pred_check
        %p127 = pneg %p126
      $region14: #{tpu_custom_call.1} parent=5 // pred_check_branch
        %129 = sbr.rel (%p127) target = $region16
      $region15: #{tpu_custom_call.1} parent=5 // pred_region
        // Predicated region
        $region17: #{tpu_custom_call.1} parent=15 // pred_check
          %p130 = pneg %p51
        $region18: #{tpu_custom_call.1} parent=15 // pred_check_branch
          %132 = sbr.rel (%p130) target = $region20
        $region19: #{tpu_custom_call.1} parent=15 // pred_region
          %s133 = sand.u32 %s41, 1
          %s134 = scalar_lea.sflag [#allocation5], %s133
          %s135 = sand.u32 %s41, 1
          %s136 = smul.addr %s135, 8
          %s137 = scalar_lea.vmem [#allocation4], %s136
          %s139 = ssub.s32 128, 128
          %140 = vsyncadd %s134, %s139
          %s141 = sadd.s32 %s25, %s24
          %s142 = smul.addr %s141, 128
          %s143 = scalar_lea.hbm %s0, %s142
          %s145 = sshll.u32 %s137, 4
          %s146 = int_to_ptr.vmem [resolvable:$true] %s145
          %148 = dma.hbm_to_vmem [thread:$0]  %s143, 128, %s146, %s134
        $region20: #{tpu_custom_call.1} parent=15 // pred_fallthru
          _
        // Predicated region
        $region21: #{tpu_custom_call.1} parent=15 // pred_check
          %p149 = pneg %p79
        $region22: #{tpu_custom_call.1} parent=15 // pred_check_branch
          %151 = sbr.rel (%p149) target = $region24
        $region23: #{tpu_custom_call.1} parent=15 // pred_region
          %s152 = sand.u32 %s69, 1
          %s153 = scalar_lea.sflag [#allocation8], %s152
          %s154 = sand.u32 %s69, 1
          %s155 = smul.addr %s154, 8
          %s156 = scalar_lea.vmem [#allocation7], %s155
          %s158 = ssub.s32 128, 128
          %159 = vsyncadd %s153, %s158
          %s160 = sadd.s32 %s25, %s24
          %s161 = smul.addr %s160, 128
          %s162 = scalar_lea.hbm %s1, %s161
          %s164 = sshll.u32 %s156, 4
          %s165 = int_to_ptr.vmem [resolvable:$true] %s164
          %167 = dma.hbm_to_vmem [thread:$0]  %s162, 128, %s165, %s153
        $region24: #{tpu_custom_call.1} parent=15 // pred_fallthru
          _
      $region16: #{tpu_custom_call.1} parent=5 // pred_fallthru
        _
      %p168 = scmp.le.s32.totalorder 1, %s17
      %p169 = scmp.lt.s32.totalorder %s17, 3
      %p170 = pnand %p168, %p169
      %p171 = pneg %p170
      // Predicated region
      $region25: #{tpu_custom_call.1} parent=5 // pred_check
        _
      $region26: #{tpu_custom_call.1} parent=5 // pred_check_branch
        %173 = sbr.rel (%p170) target = $region28
      $region27: #{tpu_custom_call.1} parent=5 // pred_region
        %s174 = ssub.s32 %s17, 1
        %s175 = sand.u32 %s44, 1
        %s176 = scalar_lea.sflag [#allocation5], %s175
        %s177 = sand.u32 %s44, 1
        %s178 = smul.addr %s177, 8
        %s179 = scalar_lea.vmem [#allocation4], %s178
        // Predicated region
        $region29: #{tpu_custom_call.1} parent=27 // pred_check
          %p180 = pneg %p57
        $region30: #{tpu_custom_call.1} parent=27 // pred_check_branch
          %182 = sbr.rel (%p180) target = $region32
        $region31: #{tpu_custom_call.1} parent=27 // pred_region
          %183 = dma.done %s176, 128
        $region32: #{tpu_custom_call.1} parent=27 // pred_fallthru
          _
        %s184 = sand.u32 %s72, 1
        %s185 = scalar_lea.sflag [#allocation8], %s184
        %s186 = sand.u32 %s72, 1
        %s187 = smul.addr %s186, 8
        %s188 = scalar_lea.vmem [#allocation7], %s187
        // Predicated region
        $region33: #{tpu_custom_call.1} parent=27 // pred_check
          %p189 = pneg %p85
        $region34: #{tpu_custom_call.1} parent=27 // pred_check_branch
          %191 = sbr.rel (%p189) target = $region36
        $region35: #{tpu_custom_call.1} parent=27 // pred_region
          %192 = dma.done %s185, 128
        $region36: #{tpu_custom_call.1} parent=27 // pred_fallthru
          _
        %s193 = sand.u32 %s44, 1
        %s194 = scalar_lea.sflag [#allocation5], %s193
        %s195 = sand.u32 %s44, 1
        %s196 = smul.addr %s195, 8
        %s197 = scalar_lea.vmem [#allocation4], %s196
        %p198 = pneg %p57
        %p199 = pneg %p54
        %s200 = sand.u32 %s72, 1
        %s201 = scalar_lea.sflag [#allocation8], %s200
        %s202 = sand.u32 %s72, 1
        %s203 = smul.addr %s202, 8
        %s204 = scalar_lea.vmem [#allocation7], %s203
        %p205 = pneg %p85
        %p206 = pneg %p82
        %p207 = pneg %p111
        %p208 = pneg %p108
        %s209 = sand.u32 %s98, 1
        %s210 = scalar_lea.sflag [#allocation6], %s209
        %s211 = sand.u32 %s98, 1
        %s212 = smul.addr %s211, 8
        %s213 = scalar_lea.vmem [#allocation9], %s212
        %p214 = scmp.eq.s32.totalorder %s27, 0
        // Predicated region
        $region37: #{tpu_custom_call.1} parent=27 // pred_check
          %p215 = pneg %p214
        $region38: #{tpu_custom_call.1} parent=27 // pred_check_branch
          %217 = sbr.rel (%p215) target = $region40
        $region39: #{tpu_custom_call.1} parent=27 // pred_region
          %218 = vst [vmem:[#allocation2] sm:$0xff] 0.0
          %219 = vst [vmem:[#allocation3] sm:$0xff] 0.0
        $region40: #{tpu_custom_call.1} parent=27 // pred_fallthru
          _
        %v220 = vld [vmem:[%s179] sm:$0xff]
        %v221 = vld [vmem:[%s188] sm:$0xff]
        %v222 = vmul.f32 %v220, %v221
        %v223 = vadd.f32 %v220, %v221
        %v224 = vld [vmem:[#allocation2] sm:$0xff]
        %v225 = vadd.f32 %v222, 0.0
        %v226 = vadd.f32 %v224, %v225
        %227 = vst [vmem:[#allocation2] sm:$0xff] %v226
        %v228 = vld [vmem:[#allocation3] sm:$0xff]
        %v229 = vadd.f32 %v223, 0.0
        %v230 = vadd.f32 %v228, %v229
        %231 = vst [vmem:[#allocation3] sm:$0xff] %v230
        // Predicated region
        $region41: #{tpu_custom_call.1} parent=27 // pred_check
          %p232 = pneg %p214
        $region42: #{tpu_custom_call.1} parent=27 // pred_check_branch
          %234 = sbr.rel (%p232) target = $region44
        $region43: #{tpu_custom_call.1} parent=27 // pred_region
          %v235 = vld [vmem:[#allocation2] sm:$0xff]
          %236 = vadd.xlane.f32.xlu0 %v235
          %v237 = vpop.xlane.xlu0 %236
          %v238 = vrot.slane %v237, 4
          %v239 = vadd.f32 %v237, %v238
          %v240 = vrot.slane %v239, 2
          %v241 = vadd.f32 %v239, %v240
          %v242 = vrot.slane %v241, 1
          %v243 = vadd.f32 %v241, %v242
          %s244 = vtos %v243
          %v245 = vld [vmem:[#allocation3] sm:$0xff]
          %246 = vadd.xlane.f32.xlu0 %v245
          %v247 = vpop.xlane.xlu0 %246
          %v248 = vrot.slane %v247, 4
          %v249 = vadd.f32 %v247, %v248
          %v250 = vrot.slane %v249, 2
          %v251 = vadd.f32 %v249, %v250
          %v252 = vrot.slane %v251, 1
          %v253 = vadd.f32 %v251, %v252
          %s254 = vtos %v253
          %s255 = smul.f32 %s244, 2.0
          %s256 = sadd.f32 %s255, 1e-06
          %s257 = sadd.f32 %s254, 1e-06
          %v258 = vstv %s257
          %v259 = vrcp.pop %v258
          %s260 = vtos %v259
          %s261 = smul.f32 %s256, %s260
          %v262 = vstv %s261
          %263 = vst [vmem:[%s213] sm:$0xff] %v262
        $region44: #{tpu_custom_call.1} parent=27 // pred_fallthru
          _
        %s264 = sand.u32 %s98, 1
        %s265 = scalar_lea.sflag [#allocation6], %s264
        %s266 = sand.u32 %s98, 1
        %s267 = smul.addr %s266, 8
        %s268 = scalar_lea.vmem [#allocation9], %s267
        // Predicated region
        $region45: #{tpu_custom_call.1} parent=27 // pred_check
          %p269 = pneg %p108
        $region46: #{tpu_custom_call.1} parent=27 // pred_check_branch
          %271 = sbr.rel (%p269) target = $region48
        $region47: #{tpu_custom_call.1} parent=27 // pred_region
          %s273 = ssub.s32 128, 128
          %274 = vsyncadd %s265, %s273
          %s275 = smul.addr %s26, 128
          %s276 = scalar_lea.hbm %s2, %s275
          %s278 = sshll.u32 %s268, 4
          %s279 = int_to_ptr.vmem [resolvable:$true] %s278
          %281 = dma.vmem_to_hbm [thread:$0]  %s279, 128, %s276, %s265
        $region48: #{tpu_custom_call.1} parent=27 // pred_fallthru
          _
      $region28: #{tpu_custom_call.1} parent=5 // pred_fallthru
        _
      %p282 = scmp.le.s32.totalorder 2, %s17
      // Predicated region
      $region49: #{tpu_custom_call.1} parent=5 // pred_check
        %p283 = pneg %p282
      $region50: #{tpu_custom_call.1} parent=5 // pred_check_branch
        %285 = sbr.rel (%p283) target = $region52
      $region51: #{tpu_custom_call.1} parent=5 // pred_region
        %s286 = ssub.s32 %s17, 2
        // Predicated region
        $region53: #{tpu_custom_call.1} parent=51 // pred_check
          %p287 = pneg %p114
        $region54: #{tpu_custom_call.1} parent=51 // pred_check_branch
          %289 = sbr.rel (%p287) target = $region56
        $region55: #{tpu_custom_call.1} parent=51 // pred_region
          %s290 = sand.u32 %s99, 1
          %s291 = scalar_lea.sflag [#allocation6], %s290
          %s292 = sand.u32 %s99, 1
          %s293 = smul.addr %s292, 8
          %s294 = scalar_lea.vmem [#allocation9], %s293
          %295 = dma.done %s291, 128
        $region56: #{tpu_custom_call.1} parent=51 // pred_fallthru
          _
      $region52: #{tpu_custom_call.1} parent=5 // pred_fallthru
        _
    $region6: #{tpu_custom_call.1} parent=1 // loop_footer
      %s21 = sadd.s32 1, %s17
    $region7: #{tpu_custom_call.1} parent=1 // loop_footer_branch
      %16 = sbr.rel target = $region3
    $region8: #{tpu_custom_call.1} parent=1 // loop_exit
      _
    %296 = vsyncpa [#allocation5], 1
    %s297 = scalar_lea.sflag [#allocation5], 1
    %298 = vsyncpa %s297, 1
    %299 = vsyncpa [#allocation8], 1
    %s300 = scalar_lea.sflag [#allocation8], 1
    %301 = vsyncpa %s300, 1
    %302 = vsyncpa [#allocation6], 1
    %s303 = scalar_lea.sflag [#allocation6], 1
    %304 = vsyncpa %s303, 1

</llo_original>
